<compile_context>
chip_gen: v5e
topology: v5e:2x2
jax: 0.10.0
libtpu: 0.0.40
codegen_flags: <defaults>
</compile_context>

<pallas_src>
import functools

import jax
import jax.numpy as jnp
from jax.experimental import pallas as pl
from jax.experimental.pallas import tpu as pltpu

_EPS = 1e-12  # F.normalize default eps


def _round_up(x, m):
    return ((x + m - 1) // m) * m


def _cdiv(a, b):
    return -(-a // b)


def _huber_loss_kernel(s_ref, t_ref, out_ref, *, use_l1, m_total, tm, need_mask):
    """One (1, C, TM) tile: channel-normalize both inputs, emit partial loss.

    s_ref/t_ref: (1, C, TM) VMEM tiles.  out_ref: (1, 1, 8, 128) VMEM block
    holding the scalar partial sum broadcast across a full vreg (lane-dense
    store; the wrapper reads back only element [..., 0, 0]).
    """
    s = s_ref[0].astype(jnp.float32)  # (C, TM)
    t = t_ref[0].astype(jnp.float32)  # (C, TM)

    if need_mask:  # static: only traced when M % TM != 0
        # Zero the out-of-range tail lanes of the last tile before any math;
        # zero columns contribute exactly 0 to both norms and the loss.
        rem = m_total - pl.program_id(1) * tm     # >= tm for non-last tiles
        lane = jax.lax.broadcasted_iota(jnp.int32, s.shape, 1)
        valid = lane < rem
        s = jnp.where(valid, s, 0.0)
        t = jnp.where(valid, t, 0.0)

    # F.normalize(x, dim=1) == x * rsqrt(clamp_min(sum(x^2 over C), eps^2)).
    ss = jnp.sum(s * s, axis=0, keepdims=True)    # (1, TM)
    tt = jnp.sum(t * t, axis=0, keepdims=True)
    s_inv = jax.lax.rsqrt(jnp.maximum(ss, _EPS * _EPS))
    t_inv = jax.lax.rsqrt(jnp.maximum(tt, _EPS * _EPS))

    if use_l1:                                    # L1Loss(reduction='sum') piece
        d = s * s_inv - t * t_inv
        partial = jnp.sum(jnp.abs(d))
    else:                                         # MSELoss(reduction='sum') piece
        # ||s_n - t_n||^2 per column, without materializing s_n/t_n/d:
        #   ss*s_inv^2 + tt*t_inv^2 - 2*st*s_inv*t_inv
        st = jnp.sum(s * t, axis=0, keepdims=True)
        col = ss * (s_inv * s_inv) + tt * (t_inv * t_inv) \
            - 2.0 * st * (s_inv * t_inv)
        partial = jnp.sum(col)

    out_ref[0, 0] = jnp.full((8, 128), partial, dtype=jnp.float32)


def _choose_tile(c, m, itemsize, n):
    """Pick a lane-aligned M tile.

    Budget ~1 MiB per (C, TM) input block (2 inputs x 2 pipeline buffers plus
    in-kernel f32 temporaries stays < ~8 MiB, safe under v5e's 16 MiB scoped
    default and v7x's 64 MiB/TC).  Lane cap 32768 keeps small-C shapes from
    becoming per-step-overhead bound.  When the total block count would be
    tiny (N == 1 etc.), shrink TM so both v7x TensorCores get work.
    """
    if m < 128:
        return m, 1  # full-extent last dim (allowed even if not 128-aligned)
    budget = 1 << 20
    cap = (budget // max(1, c * itemsize)) // 128 * 128
    cap = max(128, min(32768, cap))
    tm = min(cap, (m // 128) * 128)
    m_tiles = _cdiv(m, tm)
    # v7x megacore: want at least ~4 parallel blocks overall when possible.
    min_blocks = 4
    if n * m_tiles < min_blocks:
        want_tiles = _cdiv(min_blocks, max(1, n))
        tm2 = max(128, _round_up(_cdiv(m, want_tiles), 128))
        if tm2 < tm:
            tm = tm2
            m_tiles = _cdiv(m, tm)
    return tm, m_tiles


def _normalized_diff_loss(s_3d, t_3d, *, use_l1):
    """Sum-reduced L1/L2 loss between channel-normalized (N, C, M) tensors."""
    n, c, m = s_3d.shape
    itemsize = max(jnp.dtype(s_3d.dtype).itemsize, jnp.dtype(t_3d.dtype).itemsize)
    tm, m_tiles = _choose_tile(c, m, int(itemsize), n)
    need_mask = (m % tm) != 0

    kernel = functools.partial(_huber_loss_kernel, use_l1=use_l1,
                               m_total=m, tm=tm, need_mask=need_mask)
    partials = pl.pallas_call(
        kernel,
        out_shape=jax.ShapeDtypeStruct((n, m_tiles, 8, 128), jnp.float32),
        grid_spec=pltpu.PrefetchScalarGridSpec(
            num_scalar_prefetch=0,
            grid=(n, m_tiles),
            in_specs=[
                pl.BlockSpec((1, c, tm), lambda i, j: (i, 0, j)),
                pl.BlockSpec((1, c, tm), lambda i, j: (i, 0, j)),
            ],
            out_specs=pl.BlockSpec((1, 1, 8, 128), lambda i, j: (i, j, 0, 0)),
        ),
        compiler_params=pltpu.CompilerParams(
            dimension_semantics=("parallel", "parallel"),
            vmem_limit_bytes=32 * 1024 * 1024),
    )(s_3d, t_3d)
    return jnp.sum(partials[:, :, 0, 0])


class CriterionHuberPallas:
    """JAX/Pallas port of losses/huber.py::CriterionHuber (forward pass)."""

    def __init__(self, s_channels, t_channels, norm_type="none",
                 key=jax.random.PRNGKey(42)):
        # nn.Conv2d(s_channels, t_channels, 1, bias=False) weight,
        # deterministic kaiming-uniform-like init (fan_in = s_channels).
        limit = 1.0 / (s_channels ** 0.5)
        self.conv_w = jax.random.uniform(
            key, (t_channels, s_channels), jnp.float32, -limit, limit)
        self.s_channels = s_channels
        self.t_channels = t_channels
        # self.normalize (ChannelNorm / Softmax) is constructed in the
        # reference __init__ but never used in forward; omitted from hot path.
        self.norm_type = norm_type

    def __call__(self, preds_S, preds_T, similarity):
        n, c, h, w = preds_S.shape
        if preds_S.shape[1] != preds_T.shape[1]:
            # 1x1 conv without bias (NCHW) channel adapter, wrapper-level glue.
            # TODO(synk): cannot fuse this 1x1 conv into the kernel without
            # changing reference semantics: the reference reshapes the conv
            # output with the *pre-conv* channel count, so the normalization
            # axis crosses conv-channel boundaries (quirk of the original).
            preds_S = jnp.einsum("oc,nchw->nohw", self.conv_w, preds_S)
        # NOTE: faithfully reproduces the reference reshape with the pre-conv
        # channel count `c` (only well-defined when shapes permit it).
        s_3d = preds_S.reshape(n, c, -1)
        t_3d = jax.lax.stop_gradient(preds_T).reshape(n, c, -1)
        # TODO(synk): forward-only; a custom_vjp is needed for training grads.
        # NOTE: `similarity` must be a concrete Python value (the reference
        # also branches on it in Python).
        use_l1 = bool(similarity > 0)  # similarity <= 0 -> L2(sum), else L1(sum)
        loss = _normalized_diff_loss(s_3d, t_3d, use_l1=use_l1)
        return loss / (n * h * w)


def _reference_loss(preds_S, preds_T, similarity):
    """Pure-jnp reference for sanity checking (matching-channels case)."""
    n, c, h, w = preds_S.shape
    s = preds_S.astype(jnp.float32).reshape(n, c, -1)
    t = preds_T.astype(jnp.float32).reshape(n, c, -1)
    s = s / jnp.maximum(jnp.linalg.norm(s, axis=1, keepdims=True), _EPS)
    t = t / jnp.maximum(jnp.linalg.norm(t, axis=1, keepdims=True), _EPS)
    d = s - t
    loss = jnp.sum(jnp.abs(d)) if similarity > 0 else jnp.sum(d * d)
    return loss / (n * h * w)


if __name__ == "__main__":
    key = jax.random.PRNGKey(0)

    def run_case(n, ch, h, w, dtype=jnp.float32, rtol=1e-4, atol=1e-5):
        k_s, k_t = jax.random.split(jax.random.fold_in(key, ch * h * w + n))
        preds_S = jax.random.normal(k_s, (n, ch, h, w), jnp.float32).astype(dtype)
        preds_T = jax.random.normal(k_t, (n, ch, h, w), jnp.float32).astype(dtype)
        crit = CriterionHuberPallas(s_channels=ch, t_channels=ch)
        for sim in (-1.0, 1.0):  # L2 (sum) path, then L1 (sum) path
            got = jax.block_until_ready(crit(preds_S, preds_T, similarity=sim))
            want = _reference_loss(preds_S, preds_T, sim)
            assert jnp.allclose(got, want, rtol=rtol, atol=atol), (
                (n, ch, h, w, sim, str(dtype)), got, want)

    run_case(2, 4, 16, 16)   # M = 256: clean 128-tiles, 2x2 grid
    run_case(2, 4, 10, 10)   # M = 100 < 128: single full-extent tile
    run_case(2, 4, 18, 18)   # M = 324: exercises in-kernel tail-lane masking
    run_case(1, 8, 20, 20)   # N = 1: tile-splitting for megacore + masking
    run_case(2, 4, 16, 16, dtype=jnp.bfloat16, rtol=1e-2, atol=1e-3)  # bf16 wire

    print("KERNEL_OK")
</pallas_src>

<mosaic_0001>
module attributes {stable_mosaic.version = 11 : i64} {
  func.func @_huber_loss_kernel(%arg0: i32, %arg1: i32, %arg2: memref<1x4x128xf32, #tpu.memory_space<vmem>>, %arg3: memref<1x4x128xf32, #tpu.memory_space<vmem>>, %arg4: memref<1x1x8x128xf32, #tpu.memory_space<vmem>>) attributes {dimension_semantics = [#tpu.dimension_semantics<parallel>, #tpu.dimension_semantics<parallel>], iteration_bounds = array<i64: 2, 2>, scalar_prefetch = 0 : i64, scratch_operands = 0 : i64, tpu.core_type = #tpu.core_type<tc>, window_params = [{transform_indices = @transform_0, window_bounds = array<i64: 1, 4, 128>}, {transform_indices = @transform_1, window_bounds = array<i64: 1, 4, 128>}, {transform_indices = @transform_2, window_bounds = array<i64: 1, 1, 8, 128>}]} {
    %c0 = arith.constant 0 : index
    %c0_0 = arith.constant 0 : index
    %c0_1 = arith.constant 0 : index
    %0 = vector.load %arg2[%c0, %c0_0, %c0_1] : memref<1x4x128xf32, #tpu.memory_space<vmem>>, vector<1x4x128xf32>
    %1 = vector.shape_cast %0 : vector<1x4x128xf32> to vector<4x128xf32>
    %c0_2 = arith.constant 0 : index
    %c0_3 = arith.constant 0 : index
    %c0_4 = arith.constant 0 : index
    %2 = vector.load %arg3[%c0_2, %c0_3, %c0_4] : memref<1x4x128xf32, #tpu.memory_space<vmem>>, vector<1x4x128xf32>
    %3 = vector.shape_cast %2 : vector<1x4x128xf32> to vector<4x128xf32>
    %4 = arith.mulf %1, %1 : vector<4x128xf32>
    %cst = arith.constant dense<0.000000e+00> : vector<128xf32>
    %5 = vector.multi_reduction <add>, %4, %cst [0] : vector<4x128xf32> to vector<128xf32>
    %6 = vector.shape_cast %5 : vector<128xf32> to vector<1x128xf32>
    %7 = arith.mulf %3, %3 : vector<4x128xf32>
    %cst_5 = arith.constant dense<0.000000e+00> : vector<128xf32>
    %8 = vector.multi_reduction <add>, %7, %cst_5 [0] : vector<4x128xf32> to vector<128xf32>
    %9 = vector.shape_cast %8 : vector<128xf32> to vector<1x128xf32>
    %cst_6 = arith.constant 1.000000e-24 : f32
    %10 = vector.broadcast %cst_6 : f32 to vector<1x128xf32>
    %11 = arith.maximumf %6, %10 : vector<1x128xf32>
    %12 = math.rsqrt %11 : vector<1x128xf32>
    %cst_7 = arith.constant 1.000000e-24 : f32
    %13 = vector.broadcast %cst_7 : f32 to vector<1x128xf32>
    %14 = arith.maximumf %9, %13 : vector<1x128xf32>
    %15 = math.rsqrt %14 : vector<1x128xf32>
    %16 = arith.mulf %1, %3 : vector<4x128xf32>
    %cst_8 = arith.constant dense<0.000000e+00> : vector<128xf32>
    %17 = vector.multi_reduction <add>, %16, %cst_8 [0] : vector<4x128xf32> to vector<128xf32>
    %18 = vector.shape_cast %17 : vector<128xf32> to vector<1x128xf32>
    %19 = arith.mulf %12, %12 : vector<1x128xf32>
    %20 = arith.mulf %6, %19 : vector<1x128xf32>
    %21 = arith.mulf %15, %15 : vector<1x128xf32>
    %22 = arith.mulf %9, %21 : vector<1x128xf32>
    %23 = arith.addf %20, %22 : vector<1x128xf32>
    %cst_9 = arith.constant 2.000000e+00 : f32
    %24 = vector.broadcast %cst_9 : f32 to vector<1x128xf32>
    %25 = arith.mulf %24, %18 : vector<1x128xf32>
    %26 = arith.mulf %12, %15 : vector<1x128xf32>
    %27 = arith.mulf %25, %26 : vector<1x128xf32>
    %28 = arith.subf %23, %27 : vector<1x128xf32>
    %29 = vector.shape_cast %28 : vector<1x128xf32> to vector<1x1x128xf32>
    %cst_10 = arith.constant dense<0.000000e+00> : vector<1xf32>
    %30 = vector.multi_reduction <add>, %29, %cst_10 [1, 2] : vector<1x1x128xf32> to vector<1xf32>
    %31 = vector.shape_cast %30 : vector<1xf32> to vector<1x1x1xf32>
    %32 = vector.extract %31[0, 0, 0] : f32 from vector<1x1x1xf32>
    %33 = vector.broadcast %32 : f32 to vector<8x128xf32>
    %c0_11 = arith.constant 0 : index
    %c0_12 = arith.constant 0 : index
    %c0_13 = arith.constant 0 : index
    %c0_14 = arith.constant 0 : index
    %34 = vector.load %arg4[%c0_11, %c0_12, %c0_13, %c0_14] : memref<1x1x8x128xf32, #tpu.memory_space<vmem>>, vector<1x1x8x128xf32>
    %35 = vector.shape_cast %34 : vector<1x1x8x128xf32> to vector<8x128xf32>
    %36 = vector.shape_cast %33 : vector<8x128xf32> to vector<1x1x8x128xf32>
    tpu.vector_store %arg4[%c0_11, %c0_12, %c0_13, %c0_14], %36 {strides = array<i32>} : memref<1x1x8x128xf32, #tpu.memory_space<vmem>>, vector<1x1x8x128xf32>,
    return
  }
  func.func @transform_0(%arg0: i32, %arg1: i32) -> (i32, i32, i32) {
    %c0_i32 = arith.constant 0 : i32
    %c0_i32_0 = arith.constant 0 : i32
    return %arg0, %c0_i32, %arg1 : i32, i32, i32
  }
  func.func @transform_1(%arg0: i32, %arg1: i32) -> (i32, i32, i32) {
    %c0_i32 = arith.constant 0 : i32
    %c0_i32_0 = arith.constant 0 : i32
    return %arg0, %c0_i32, %arg1 : i32, i32, i32
  }
  func.func @transform_2(%arg0: i32, %arg1: i32) -> (i32, i32, i32, i32) {
    %c0_i32 = arith.constant 0 : i32
    %c0_i32_0 = arith.constant 0 : i32
    %c0_i32_1 = arith.constant 0 : i32
    return %arg0, %arg1, %c0_i32, %c0_i32_0 : i32, i32, i32, i32
  }
}

</mosaic_0001>

<llo_original>
// kernel: tpu_custom_call.1
$region0: #{tpu_custom_call.1}
  #allocation0 [shape = 'u32[]', space=smem, size = 0x4, offset = 0x4, fixed_abs, tag = 'smem constant byte address 0x4 - core index']
  #allocation1 [shape = 'u32[72,128]{1,0:T(1,128)}', space=vmem, size = 0x9000, scoped, tag = 'internal scratch']
  %s0 = inlined_call_operand.hbm [shape: f32[2,4,256], index: 0, kind: input, shape index: {}]
  %s1 = inlined_call_operand.hbm [shape: f32[2,4,256], index: 1, kind: input, shape index: {}]
  %s2 = inlined_call_operand.hbm [shape: f32[2,2,8,128], index: 2, kind: output, shape index: {}]
  %s3 = sld [smem:[#allocation0]]
  $region49: #{tpu_custom_call.1} parent=0
    _
  %s5 = ssub.s32 1, %s3
  %s6 = scalar_select 0, %s5, %s3
  $region1: #{tpu_custom_call.1} parent=0
    #allocation2 [shape = 'u8[4096]{0}', space=vmem, size = 0x1000, scoped, tag = 'input window, operand 0']
    #allocation3 [shape = 's32[2]{0}', space=sflag, size = 0x8, scoped, tag = 'scoped memory for tpu_custom_call.1']
    #allocation4 [shape = 's32[2]{0}', space=sflag, size = 0x8, scoped, tag = 'scoped memory for tpu_custom_call.1']
    #allocation5 [shape = 'u8[4096]{0}', space=vmem, size = 0x1000, scoped, tag = 'input window, operand 1']
    #allocation6 [shape = 's32[2]{0}', space=sflag, size = 0x8, scoped, tag = 'scoped memory for tpu_custom_call.1']
    #allocation7 [shape = 'u8[8192]{0}', space=vmem, size = 0x2000, scoped, tag = 'output window, operand 0']
    %7 = vsyncpa [#allocation3], 0
    %s8 = scalar_lea.sflag [#allocation3], 1
    %9 = vsyncpa %s8, 0
    %10 = vsyncpa [#allocation6], 0
    %s11 = scalar_lea.sflag [#allocation6], 1
    %12 = vsyncpa %s11, 0
    %13 = vsyncpa [#allocation4], 0
    %s14 = scalar_lea.sflag [#allocation4], 1
    %15 = vsyncpa %s14, 0
    loop: start=0, step=1, limit=6
    $region2: #{tpu_custom_call.1} parent=1 // loop_pre_header
      _
    $region3: #{tpu_custom_call.1} parent=1 // loop_header
      %s17 = sphi 0, %s21
      %p18 = scmp.ge.s32.totalorder %s17, 6
      %s24 = sphi 0, %s36
      %s25 = sphi 0, %s32
      %s26 = sphi 0, %s24
      %s27 = sphi 0, %s25
      %s28 = sphi 0, %s26
      %s29 = sphi 0, %s27
      %s41 = sphi 0, %s43
      %s44 = sphi 0, %s41
      %s45 = sphi 0, %s44
      %s61 = sphi 0, %s45
      %s69 = sphi 0, %s71
      %s72 = sphi 0, %s69
      %s73 = sphi 0, %s72
      %s89 = sphi 0, %s73
      %s97 = sphi 0, %s99
      %s100 = sphi 0, %s97
      %s101 = sphi 0, %s100
      %s117 = sphi 0, %s101
    $region4: #{tpu_custom_call.1} parent=1 // loop_header_branch
      %20 = sbr.rel (%p18) target = $region8
    $region5: #{tpu_custom_call.1} parent=1 // loop_body
      %s22 = ssub.s32 %s17, 1
      %s23 = ssub.s32 %s17, 2
      %s30 = sadd.s32 1, %s25
      %p31 = scmp.ge.s32.totalorder %s30, 2
      %s32 = scalar_select %p31, 0, %s30
      %s33 = sadd.s32 1, %s24
      %s34 = scalar_select %p31, %s33, %s24
      %p35 = scmp.ge.s32.totalorder %s34, 2
      %s36 = scalar_select %p35, 0, %s34
      %s37 = ssub.s32 %s24, %s36
      %s38 = ssub.s32 %s25, %s32
      %s39 = sor.u32 %s37, %s38
      %p40 = scmp.eq.s32.totalorder %s39, 0
      %s42 = sadd.s32 %s41, 1
      %s43 = scalar_select %p40, %s41, %s42
      %p46 = pneg %p40
      %p47 = scmp.eq.s32.totalorder %s17, 3
      %p48 = por %p46, %p47
      %p49 = scmp.ne.s32.totalorder %s41, %s44
      %p50 = scmp.eq.s32.totalorder %s17, 0
      %p51 = por %p49, %p50
      %p52 = scmp.ne.s32.totalorder %s41, %s44
      %p53 = scmp.eq.s32.totalorder %s22, 3
      %p54 = por %p52, %p53
      %p55 = scmp.ne.s32.totalorder %s44, %s45
      %p56 = scmp.eq.s32.totalorder %s22, 0
      %p57 = por %p55, %p56
      %p58 = scmp.ne.s32.totalorder %s44, %s45
      %p59 = scmp.eq.s32.totalorder %s23, 3
      %p60 = por %p58, %p59
      %p62 = scmp.ne.s32.totalorder %s45, %s61
      %p63 = scmp.eq.s32.totalorder %s23, 0
      %p64 = por %p62, %p63
      %s65 = ssub.s32 %s24, %s36
      %s66 = ssub.s32 %s25, %s32
      %s67 = sor.u32 %s65, %s66
      %p68 = scmp.eq.s32.totalorder %s67, 0
      %s70 = sadd.s32 %s69, 1
      %s71 = scalar_select %p68, %s69, %s70
      %p74 = pneg %p68
      %p75 = scmp.eq.s32.totalorder %s17, 3
      %p76 = por %p74, %p75
      %p77 = scmp.ne.s32.totalorder %s69, %s72
      %p78 = scmp.eq.s32.totalorder %s17, 0
      %p79 = por %p77, %p78
      %p80 = scmp.ne.s32.totalorder %s69, %s72
      %p81 = scmp.eq.s32.totalorder %s22, 3
      %p82 = por %p80, %p81
      %p83 = scmp.ne.s32.totalorder %s72, %s73
      %p84 = scmp.eq.s32.totalorder %s22, 0
      %p85 = por %p83, %p84
      %p86 = scmp.ne.s32.totalorder %s72, %s73
      %p87 = scmp.eq.s32.totalorder %s23, 3
      %p88 = por %p86, %p87
      %p90 = scmp.ne.s32.totalorder %s73, %s89
      %p91 = scmp.eq.s32.totalorder %s23, 0
      %p92 = por %p90, %p91
      %s93 = ssub.s32 %s24, %s36
      %s94 = ssub.s32 %s25, %s32
      %s95 = sor.u32 %s93, %s94
      %p96 = scmp.eq.s32.totalorder %s95, 0
      %s98 = sadd.s32 %s97, 1
      %s99 = scalar_select %p96, %s97, %s98
      %p102 = pneg %p96
      %p103 = scmp.eq.s32.totalorder %s17, 3
      %p104 = por %p102, %p103
      %p105 = scmp.ne.s32.totalorder %s97, %s100
      %p106 = scmp.eq.s32.totalorder %s17, 0
      %p107 = por %p105, %p106
      %p108 = scmp.ne.s32.totalorder %s97, %s100
      %p109 = scmp.eq.s32.totalorder %s22, 3
      %p110 = por %p108, %p109
      %p111 = scmp.ne.s32.totalorder %s100, %s101
      %p112 = scmp.eq.s32.totalorder %s22, 0
      %p113 = por %p111, %p112
      %p114 = scmp.ne.s32.totalorder %s100, %s101
      %p115 = scmp.eq.s32.totalorder %s23, 3
      %p116 = por %p114, %p115
      %p118 = scmp.ne.s32.totalorder %s101, %s117
      %p119 = scmp.eq.s32.totalorder %s23, 0
      %p120 = por %p118, %p119
      %p121 = scmp.le.s32.totalorder 1, %s17
      %p122 = scmp.lt.s32.totalorder %s17, 5
      %p123 = pnand %p121, %p122
      %p124 = pneg %p123
      // Predicated region
      $region9: #{tpu_custom_call.1} parent=5 // pred_check
        _
      $region10: #{tpu_custom_call.1} parent=5 // pred_check_branch
        %126 = sbr.rel (%p123) target = $region12
      $region11: #{tpu_custom_call.1} parent=5 // pred_region
        %s127 = ssub.s32 %s17, 1
      $region12: #{tpu_custom_call.1} parent=5 // pred_fallthru
        _
      %p128 = scmp.lt.s32.totalorder %s17, 4
      // Predicated region
      $region13: #{tpu_custom_call.1} parent=5 // pred_check
        %p129 = pneg %p128
      $region14: #{tpu_custom_call.1} parent=5 // pred_check_branch
        %131 = sbr.rel (%p129) target = $region16
      $region15: #{tpu_custom_call.1} parent=5 // pred_region
        // Predicated region
        $region17: #{tpu_custom_call.1} parent=15 // pred_check
          %p132 = pneg %p51
        $region18: #{tpu_custom_call.1} parent=15 // pred_check_branch
          %134 = sbr.rel (%p132) target = $region20
        $region19: #{tpu_custom_call.1} parent=15 // pred_region
          %s135 = sand.u32 %s41, 1
          %s136 = scalar_lea.sflag [#allocation3], %s135
          %s137 = sand.u32 %s41, 1
          %s138 = smul.addr %s137, 4
          %s139 = scalar_lea.vmem [#allocation2], %s138
          %141 = vsyncadd %s136, 0
          %s142 = smul.addr %s24, 2
          %s143 = sadd.s32 %s25, %s142
          %s144 = smul.addr %s143, 4
          %s145 = scalar_lea.hbm %s0, %s144
          %s147 = sshll.u32 %s145, 4
          %s148 = int_to_ptr.hbm [resolvable:$true] %s147
          %s149 = sshll.u32 %s139, 4
          %s150 = int_to_ptr.vmem [resolvable:$true] %s149
          %152 = dma.hbm_to_vmem [thread:$0]  %s148, 64, %s150, %s136
        $region20: #{tpu_custom_call.1} parent=15 // pred_fallthru
          _
        // Predicated region
        $region21: #{tpu_custom_call.1} parent=15 // pred_check
          %p153 = pneg %p79
        $region22: #{tpu_custom_call.1} parent=15 // pred_check_branch
          %155 = sbr.rel (%p153) target = $region24
        $region23: #{tpu_custom_call.1} parent=15 // pred_region
          %s156 = sand.u32 %s69, 1
          %s157 = scalar_lea.sflag [#allocation6], %s156
          %s158 = sand.u32 %s69, 1
          %s159 = smul.addr %s158, 4
          %s160 = scalar_lea.vmem [#allocation5], %s159
          %162 = vsyncadd %s157, 0
          %s163 = smul.addr %s24, 2
          %s164 = sadd.s32 %s25, %s163
          %s165 = smul.addr %s164, 4
          %s166 = scalar_lea.hbm %s1, %s165
          %s168 = sshll.u32 %s166, 4
          %s169 = int_to_ptr.hbm [resolvable:$true] %s168
          %s170 = sshll.u32 %s160, 4
          %s171 = int_to_ptr.vmem [resolvable:$true] %s170
          %173 = dma.hbm_to_vmem [thread:$0]  %s169, 64, %s171, %s157
        $region24: #{tpu_custom_call.1} parent=15 // pred_fallthru
          _
      $region16: #{tpu_custom_call.1} parent=5 // pred_fallthru
        _
      %p174 = scmp.le.s32.totalorder 1, %s17
      %p175 = scmp.lt.s32.totalorder %s17, 5
      %p176 = pnand %p174, %p175
      %p177 = pneg %p176
      // Predicated region
      $region25: #{tpu_custom_call.1} parent=5 // pred_check
        _
      $region26: #{tpu_custom_call.1} parent=5 // pred_check_branch
        %179 = sbr.rel (%p176) target = $region28
      $region27: #{tpu_custom_call.1} parent=5 // pred_region
        %s180 = ssub.s32 %s17, 1
        %s181 = sand.u32 %s44, 1
        %s182 = scalar_lea.sflag [#allocation3], %s181
        %s183 = sand.u32 %s44, 1
        %s184 = smul.addr %s183, 4
        %s185 = scalar_lea.vmem [#allocation2], %s184
        // Predicated region
        $region29: #{tpu_custom_call.1} parent=27 // pred_check
          %p186 = pneg %p57
        $region30: #{tpu_custom_call.1} parent=27 // pred_check_branch
          %188 = sbr.rel (%p186) target = $region32
        $region31: #{tpu_custom_call.1} parent=27 // pred_region
          %190 = dma.done %s182, 64
        $region32: #{tpu_custom_call.1} parent=27 // pred_fallthru
          _
        %s191 = sand.u32 %s72, 1
        %s192 = scalar_lea.sflag [#allocation6], %s191
        %s193 = sand.u32 %s72, 1
        %s194 = smul.addr %s193, 4
        %s195 = scalar_lea.vmem [#allocation5], %s194
        // Predicated region
        $region33: #{tpu_custom_call.1} parent=27 // pred_check
          %p196 = pneg %p85
        $region34: #{tpu_custom_call.1} parent=27 // pred_check_branch
          %198 = sbr.rel (%p196) target = $region36
        $region35: #{tpu_custom_call.1} parent=27 // pred_region
          %200 = dma.done %s192, 64
        $region36: #{tpu_custom_call.1} parent=27 // pred_fallthru
          _
        %s201 = sand.u32 %s44, 1
        %s202 = scalar_lea.sflag [#allocation3], %s201
        %s203 = sand.u32 %s44, 1
        %s204 = smul.addr %s203, 4
        %s205 = scalar_lea.vmem [#allocation2], %s204
        %p206 = pneg %p57
        %p207 = pneg %p54
        %s208 = sand.u32 %s72, 1
        %s209 = scalar_lea.sflag [#allocation6], %s208
        %s210 = sand.u32 %s72, 1
        %s211 = smul.addr %s210, 4
        %s212 = scalar_lea.vmem [#allocation5], %s211
        %p213 = pneg %p85
        %p214 = pneg %p82
        %p215 = pneg %p113
        %p216 = pneg %p110
        %s217 = sand.u32 %s100, 1
        %s218 = scalar_lea.sflag [#allocation4], %s217
        %s219 = sand.u32 %s100, 1
        %s220 = smul.addr %s219, 8
        %s221 = scalar_lea.vmem [#allocation7], %s220
        %v222 = vld [vmem:[%s185] sm:$0xf]
        %v223 = vld [vmem:[%s195] sm:$0xf]
        %v224 = vmul.f32 %v222, %v222
        %vm225 = vcmask 1043456
        %v226 = vsel %vm225, %v224, 0.0
        %v227 = vrot.slane %v226, 4
        %v228 = vadd.f32 %v226, %v227
        %v229 = vrot.slane %v228, 2
        %v230 = vadd.f32 %v228, %v229
        %v231 = vrot.slane %v230, 1
        %v232 = vadd.f32 %v230, %v231
        %v233 = vmul.f32 %v223, %v223
        %v234 = vsel %vm225, %v233, 0.0
        %v235 = vrot.slane %v234, 4
        %v236 = vadd.f32 %v234, %v235
        %v237 = vrot.slane %v236, 2
        %v238 = vadd.f32 %v236, %v237
        %v239 = vrot.slane %v238, 1
        %v240 = vadd.f32 %v238, %v239
        %v241 = vmax.f32 %v232, 1e-24
        %v242 = vrsqrt.pop %v241
        %v243 = vmul.f32 %v242, %v241
        %v244 = vmul.f32 %v243, %v242
        %v245 = vmul.f32 0.5, %v244
        %v246 = vsub.f32 1.5, %v245
        %v247 = vmul.f32 %v242, %v246
        %vm248 = vweird.f32 %v241
        %vm249 = vweird.f32 %v242
        %vm250 = vmor %vm248, %vm249
        %v251 = vsel %vm250, %v242, %v247
        %v252 = vmax.f32 %v240, 1e-24
        %v253 = vrsqrt.pop %v252
        %v254 = vmul.f32 %v253, %v252
        %v255 = vmul.f32 %v254, %v253
        %v256 = vmul.f32 0.5, %v255
        %v257 = vsub.f32 1.5, %v256
        %v258 = vmul.f32 %v253, %v257
        %vm259 = vweird.f32 %v252
        %vm260 = vweird.f32 %v253
        %vm261 = vmor %vm259, %vm260
        %v262 = vsel %vm261, %v253, %v258
        %v263 = vmul.f32 %v222, %v223
        %v264 = vsel %vm225, %v263, 0.0
        %v265 = vrot.slane %v264, 4
        %v266 = vadd.f32 %v264, %v265
        %v267 = vrot.slane %v266, 2
        %v268 = vadd.f32 %v266, %v267
        %v269 = vrot.slane %v268, 1
        %v270 = vadd.f32 %v268, %v269
        %v271 = vmul.f32 %v251, %v251
        %v272 = vmul.f32 %v232, %v271
        %v273 = vmul.f32 %v262, %v262
        %v274 = vmul.f32 %v240, %v273
        %v275 = vadd.f32 %v272, %v274
        %v276 = vmul.f32 %v270, 2.0
        %v277 = vmul.f32 %v251, %v262
        %v278 = vmul.f32 %v276, %v277
        %v279 = vsub.f32 %v275, %v278
        %vm280 = vcmask 1040384
        %v281 = vsel %vm280, %v279, 0.0
        %282 = vadd.xlane.f32.xlu0 %v281
        %v283 = vpop.xlane.xlu0 %282
        %v284 = vrot.slane %v283, 4
        %v285 = vadd.f32 %v283, %v284
        %v286 = vrot.slane %v285, 2
        %v287 = vadd.f32 %v285, %v286
        %v288 = vrot.slane %v287, 1
        %v289 = vadd.f32 %v287, %v288
        %s290 = vtos %v289
        %v291 = vstv %s290
        %292 = vst [vmem:[%s221] sm:$0xff] %v291
        %s293 = sand.u32 %s100, 1
        %s294 = scalar_lea.sflag [#allocation4], %s293
        %s295 = sand.u32 %s100, 1
        %s296 = smul.addr %s295, 8
        %s297 = scalar_lea.vmem [#allocation7], %s296
        // Predicated region
        $region37: #{tpu_custom_call.1} parent=27 // pred_check
          %p298 = pneg %p110
        $region38: #{tpu_custom_call.1} parent=27 // pred_check_branch
          %300 = sbr.rel (%p298) target = $region40
        $region39: #{tpu_custom_call.1} parent=27 // pred_region
          %302 = vsyncadd %s294, 0
          %s303 = smul.addr %s26, 2
          %s304 = sadd.s32 %s27, %s303
          %s305 = smul.addr %s304, 8
          %s306 = scalar_lea.hbm %s2, %s305
          %s308 = sshll.u32 %s297, 4
          %s309 = int_to_ptr.vmem [resolvable:$true] %s308
          %s310 = sshll.u32 %s306, 4
          %s311 = int_to_ptr.hbm [resolvable:$true] %s310
          %313 = dma.vmem_to_hbm [thread:$0]  %s309, 128, %s311, %s294
        $region40: #{tpu_custom_call.1} parent=27 // pred_fallthru
          _
      $region28: #{tpu_custom_call.1} parent=5 // pred_fallthru
        _
      %p314 = scmp.le.s32.totalorder 2, %s17
      // Predicated region
      $region41: #{tpu_custom_call.1} parent=5 // pred_check
        %p315 = pneg %p314
      $region42: #{tpu_custom_call.1} parent=5 // pred_check_branch
        %317 = sbr.rel (%p315) target = $region44
      $region43: #{tpu_custom_call.1} parent=5 // pred_region
        %s318 = ssub.s32 %s17, 2
        // Predicated region
        $region45: #{tpu_custom_call.1} parent=43 // pred_check
          %p319 = pneg %p116
        $region46: #{tpu_custom_call.1} parent=43 // pred_check_branch
          %321 = sbr.rel (%p319) target = $region48
        $region47: #{tpu_custom_call.1} parent=43 // pred_region
          %s322 = sand.u32 %s101, 1
          %s323 = scalar_lea.sflag [#allocation4], %s322
          %s324 = sand.u32 %s101, 1
          %s325 = smul.addr %s324, 8
          %s326 = scalar_lea.vmem [#allocation7], %s325
          %328 = dma.done %s323, 128
        $region48: #{tpu_custom_call.1} parent=43 // pred_fallthru
          _
      $region44: #{tpu_custom_call.1} parent=5 // pred_fallthru
        _
    $region6: #{tpu_custom_call.1} parent=1 // loop_footer
      %s21 = sadd.s32 1, %s17
    $region7: #{tpu_custom_call.1} parent=1 // loop_footer_branch
      %16 = sbr.rel target = $region3
    $region8: #{tpu_custom_call.1} parent=1 // loop_exit
      _
    %329 = vsyncpa [#allocation3], 1
    %s330 = scalar_lea.sflag [#allocation3], 1
    %331 = vsyncpa %s330, 1
    %332 = vsyncpa [#allocation6], 1
    %s333 = scalar_lea.sflag [#allocation6], 1
    %334 = vsyncpa %s333, 1
    %335 = vsyncpa [#allocation4], 1
    %s336 = scalar_lea.sflag [#allocation4], 1
    %337 = vsyncpa %s336, 1

</llo_original>
